<compile_context>
chip_gen: v7x
topology: tpu7x:2x2x1
jax: 0.10.0
libtpu: 0.0.40
codegen_flags: <defaults>
</compile_context>

<pallas_src>
import functools

import jax
import jax.numpy as jnp
from jax import lax
from jax.experimental import pallas as pl
from jax.experimental.pallas import tpu as pltpu

LANES = 128


def _round_up(x, m):
    return ((x + m - 1) // m) * m


def _sublane_rows(dtype):
    # Rows of this dtype that fill one packed vreg: 8 (f32), 16 (bf16), 32 (int8).
    return 8 * (4 // jnp.dtype(dtype).itemsize)


def _device_kind():
    try:
        return (jax.devices()[0].device_kind or "").lower()
    except Exception:  # pragma: no cover - no devices / CPU fallback
        return ""


def _dice_bce_kernel(x_ref, t_ref,
                     o_xt_ref, o_s_ref, o_bce_ref,
                     acc_xt, acc_s, acc_bce,
                     *, block_rows, chunk_rows, total_rows, unroll):
    c = pl.program_id(0)
    j = pl.program_id(1)
    nj = pl.num_programs(1)

    @pl.when(j == 0)
    def _init():
        acc_xt[...] = jnp.zeros_like(acc_xt)
        acc_s[...] = jnp.zeros_like(acc_s)
        acc_bce[...] = jnp.zeros_like(acc_bce)

    tile_idx = c * nj + j
    rows_left = total_rows - tile_idx * block_rows
    n_chunks = block_rows // chunk_rows

    def accumulate(masked):
        # Hoisted constant (only needed for the ragged edge tile).
        row_iota = (lax.broadcasted_iota(jnp.int32, (chunk_rows, LANES), 0)
                    if masked else None)

        def body(k, carry):
            a_xt, a_s, a_bce = carry
            r0 = pl.multiple_of(k * chunk_rows, chunk_rows)
            x = x_ref[pl.ds(r0, chunk_rows), :].astype(jnp.float32)
            t = t_ref[pl.ds(r0, chunk_rows), :].astype(jnp.float32)
            if masked:
                valid = (r0 + row_iota) < rows_left
                x = jnp.where(valid, x, 0.0)
                t = jnp.where(valid, t, 0.0)
            # PyTorch binary_cross_entropy clamps the log terms at -100.
            log_x = jnp.maximum(jnp.log(x), -100.0)
            log_1mx = jnp.maximum(jnp.log(1.0 - x), -100.0)
            # t*log(x) + (1-t)*log(1-x) == t*(log_x - log_1mx) + log_1mx
            bce = t * (log_x - log_1mx) + log_1mx      # negated at the end
            return (a_xt + x * t, a_s + (x + t), a_bce + bce)

        zeros = jnp.zeros((chunk_rows, LANES), jnp.float32)
        a_xt, a_s, a_bce = lax.fori_loop(
            0, n_chunks, body, (zeros, zeros, zeros), unroll=unroll)
        # Single small RMW per grid step (3 x one packed vreg).
        acc_xt[...] += a_xt
        acc_s[...] += a_s
        acc_bce[...] += a_bce

    @pl.when(rows_left >= block_rows)
    def _full_tile():
        accumulate(masked=False)

    @pl.when(jnp.logical_and(rows_left > 0, rows_left < block_rows))
    def _ragged_tile():
        accumulate(masked=True)
    # rows_left <= 0 (tile entirely past the data): skip, contributes nothing.

    @pl.when(j == nj - 1)
    def _finalize():
        o_xt_ref[0] = acc_xt[...]
        o_s_ref[0] = acc_s[...]
        o_bce_ref[0] = acc_bce[...]


def _partial_sums_jnp(x, t):
    """Plain-JAX partial sums (sum x*t, sum x+t, sum bce) for the tiny tail."""
    x = x.astype(jnp.float32)
    t = t.astype(jnp.float32)
    log_x = jnp.maximum(jnp.log(x), -100.0)
    log_1mx = jnp.maximum(jnp.log(1.0 - x), -100.0)
    bce = t * (log_x - log_1mx) + log_1mx
    return jnp.sum(x * t), jnp.sum(x + t), jnp.sum(bce)


def dice_bce_loss(inputs, targets, eps=1e-6):
    """Equivalent of DiceBCELoss.forward(inputs, targets, eps)."""
    x = jnp.asarray(inputs).reshape(-1)
    t = jnp.asarray(targets).reshape(-1)

    # Probabilities: keep f32/bf16 narrow in HBM; anything else -> f32.
    if x.dtype not in (jnp.float32, jnp.bfloat16):
        x = x.astype(jnp.float32)
    # Targets: keep f32/bf16/int8 as-is; bool/uint8 -> int8 (same 1-byte
    # width, values in [0,1]); anything else -> f32.
    if t.dtype in (jnp.bool_, jnp.uint8):
        t = t.astype(jnp.int8)
    elif t.dtype not in (jnp.float32, jnp.bfloat16, jnp.int8):
        t = t.astype(jnp.float32)

    n = x.shape[0]
    if n == 0:
        return jnp.float32(jnp.nan)   # matches torch: mean over empty is nan

    kind = _device_kind()
    is_v7 = "v7" in kind
    is_v5 = "v5" in kind

    chunk_rows = max(_sublane_rows(x.dtype), _sublane_rows(t.dtype))
    max_tile_rows = 4096 if is_v5 else 8192          # both multiples of 32
    align = chunk_rows * LANES

    # Chunk-aligned prefix goes through the kernel (reshape is a bitcast);
    # the tail (< chunk_rows*128 + 0 elements) is folded in with plain jnp.
    rows = (n // align) * chunk_rows
    prefix_n = rows * LANES

    if prefix_n < n:
        tail_xt, tail_s, tail_bce = _partial_sums_jnp(x[prefix_n:], t[prefix_n:])
    else:
        tail_xt = tail_s = tail_bce = jnp.float32(0.0)

    if rows > 0:
        x2 = (x if prefix_n == n else x[:prefix_n]).reshape(rows, LANES)
        t2 = (t if prefix_n == n else t[:prefix_n]).reshape(rows, LANES)

        block_rows = min(max_tile_rows, rows)        # multiple of chunk_rows
        assert block_rows % chunk_rows == 0
        num_tiles = pl.cdiv(rows, block_rows)
        core_splits = 2 if (is_v7 and num_tiles > 1) else 1
        tiles_per_core = pl.cdiv(num_tiles, core_splits)
        unroll = max(1, min(32 // chunk_rows, block_rows // chunk_rows))

        def in_map(c, j):
            # Tiles past the end re-read the last valid block; the kernel
            # skips them (rows_left <= 0), so they contribute nothing.
            return (jnp.minimum(c * tiles_per_core + j, num_tiles - 1), 0)

        kernel = functools.partial(
            _dice_bce_kernel, block_rows=block_rows, chunk_rows=chunk_rows,
            total_rows=rows, unroll=unroll)

        part_shape = jax.ShapeDtypeStruct(
            (core_splits, chunk_rows, LANES), jnp.float32)
        out_block = pl.BlockSpec((1, chunk_rows, LANES), lambda c, j: (c, 0, 0))

        out_xt, out_s, out_bce = pl.pallas_call(
            kernel,
            out_shape=(part_shape, part_shape, part_shape),
            grid_spec=pltpu.PrefetchScalarGridSpec(
                num_scalar_prefetch=0,
                grid=(core_splits, tiles_per_core),
                in_specs=[
                    pl.BlockSpec((block_rows, LANES), in_map),
                    pl.BlockSpec((block_rows, LANES), in_map),
                ],
                out_specs=(out_block, out_block, out_block),
                scratch_shapes=[
                    pltpu.VMEM((chunk_rows, LANES), jnp.float32),  # sum x*t
                    pltpu.VMEM((chunk_rows, LANES), jnp.float32),  # sum x+t
                    pltpu.VMEM((chunk_rows, LANES), jnp.float32),  # bce
                ],
            ),
            compiler_params=pltpu.CompilerParams(
                dimension_semantics=("parallel", "arbitrary"),
                vmem_limit_bytes=32 * 1024 * 1024,
            ),
        )(x2, t2)

        k_xt = jnp.sum(out_xt)
        k_s = jnp.sum(out_s)
        k_bce = jnp.sum(out_bce)
    else:
        k_xt = k_s = k_bce = jnp.float32(0.0)

    intersection = k_xt + tail_xt
    denom = k_s + tail_s                     # sum(x) + sum(t)
    bce_mean = -(k_bce + tail_bce) / n
    dice_loss = 1.0 - (2.0 * intersection + eps) / (denom + eps)
    return (bce_mean + dice_loss) * 0.5


if __name__ == "__main__":
    key = jax.random.PRNGKey(0)
    k1, k2, k3, k4 = jax.random.split(key, 4)

    def reference(inputs, targets, eps=1e-6):
        x = inputs.reshape(-1).astype(jnp.float32)
        t = targets.reshape(-1).astype(jnp.float32)
        inter = jnp.sum(x * t)
        dice = 1.0 - (2.0 * inter + eps) / (jnp.sum(x) + jnp.sum(t) + eps)
        bce = jnp.mean(
            -(t * jnp.maximum(jnp.log(x), -100.0)
              + (1.0 - t) * jnp.maximum(jnp.log(1.0 - x), -100.0)))
        return (bce + dice) / 2.0

    # Case 1: lane/chunk-aligned f32 probabilities + f32 targets (NCHW).
    shape = (2, 4, 16, 16)
    inputs = jax.nn.sigmoid(jax.random.normal(k1, shape, dtype=jnp.float32))
    targets = (jax.random.uniform(k2, shape) > 0.5).astype(jnp.float32)
    loss = jax.block_until_ready(dice_bce_loss(inputs, targets))
    ref = reference(inputs, targets)
    assert jnp.allclose(loss, ref, rtol=1e-5, atol=1e-5), (loss, ref)

    # Case 2: unaligned length + narrow int8 binary mask targets
    # (exercises the in-kernel int8 upcast path and the plain-jnp tail).
    shape2 = (2, 4, 24, 24)   # 4608 elements: 4096 via kernel, 512 via tail
    inputs2 = jax.nn.sigmoid(jax.random.normal(k3, shape2, dtype=jnp.float32))
    mask2 = jax.random.uniform(k4, shape2) > 0.5
    loss2 = jax.block_until_ready(
        dice_bce_loss(inputs2, mask2.astype(jnp.int8)))
    ref2 = reference(inputs2, mask2.astype(jnp.float32))
    assert jnp.allclose(loss2, ref2, rtol=1e-5, atol=1e-5), (loss2, ref2)

    # Case 3: bf16 probabilities (16-row packed chunks) + f32 targets.
    inputs3 = inputs.astype(jnp.bfloat16)
    loss3 = jax.block_until_ready(dice_bce_loss(inputs3, targets))
    ref3 = reference(inputs3, targets)
    assert jnp.allclose(loss3, ref3, rtol=1e-5, atol=1e-5), (loss3, ref3)

    print("KERNEL_OK")
</pallas_src>

<mosaic_0001>
module attributes {stable_mosaic.version = 11 : i64} {
  func.func @_dice_bce_kernel(%arg0: i32, %arg1: i32, %arg2: memref<16x128xf32, #tpu.memory_space<vmem>>, %arg3: memref<16x128xf32, #tpu.memory_space<vmem>>, %arg4: memref<1x8x128xf32, #tpu.memory_space<vmem>>, %arg5: memref<1x8x128xf32, #tpu.memory_space<vmem>>, %arg6: memref<1x8x128xf32, #tpu.memory_space<vmem>>, %arg7: memref<8x128xf32, #tpu.memory_space<vmem>>, %arg8: memref<8x128xf32, #tpu.memory_space<vmem>>, %arg9: memref<8x128xf32, #tpu.memory_space<vmem>>) attributes {dimension_semantics = [#tpu.dimension_semantics<parallel>, #tpu.dimension_semantics<arbitrary>], iteration_bounds = array<i64: 1, 1>, scalar_prefetch = 0 : i64, scratch_operands = 3 : i64, tpu.core_type = #tpu.core_type<tc>, window_params = [{transform_indices = @transform_0, window_bounds = array<i64: 16, 128>}, {transform_indices = @transform_1, window_bounds = array<i64: 16, 128>}, {transform_indices = @transform_2, window_bounds = array<i64: 1, 8, 128>}, {transform_indices = @transform_3, window_bounds = array<i64: 1, 8, 128>}, {transform_indices = @transform_4, window_bounds = array<i64: 1, 8, 128>}]} {
    %c0_i32 = arith.constant 0 : i32
    %0 = arith.cmpi eq, %arg1, %c0_i32 : i32
    %1 = arith.extui %0 : i1 to i32
    %c0_i32_0 = arith.constant 0 : i32
    %2 = arith.cmpi ne, %1, %c0_i32_0 : i32
    scf.if %2 {
      %cst = arith.constant 0.000000e+00 : f32
      %18 = vector.broadcast %cst : f32 to vector<8x128xf32>
      %c0 = arith.constant 0 : index
      %c0_9 = arith.constant 0 : index
      %19 = vector.load %arg7[%c0, %c0_9] : memref<8x128xf32, #tpu.memory_space<vmem>>, vector<8x128xf32>
      tpu.vector_store %arg7[%c0, %c0_9], %18 {strides = array<i32>} : memref<8x128xf32, #tpu.memory_space<vmem>>, vector<8x128xf32>,
      %cst_10 = arith.constant 0.000000e+00 : f32
      %20 = vector.broadcast %cst_10 : f32 to vector<8x128xf32>
      %c0_11 = arith.constant 0 : index
      %c0_12 = arith.constant 0 : index
      %21 = vector.load %arg8[%c0_11, %c0_12] : memref<8x128xf32, #tpu.memory_space<vmem>>, vector<8x128xf32>
      tpu.vector_store %arg8[%c0_11, %c0_12], %20 {strides = array<i32>} : memref<8x128xf32, #tpu.memory_space<vmem>>, vector<8x128xf32>,
      %cst_13 = arith.constant 0.000000e+00 : f32
      %22 = vector.broadcast %cst_13 : f32 to vector<8x128xf32>
      %c0_14 = arith.constant 0 : index
      %c0_15 = arith.constant 0 : index
      %23 = vector.load %arg9[%c0_14, %c0_15] : memref<8x128xf32, #tpu.memory_space<vmem>>, vector<8x128xf32>
      tpu.vector_store %arg9[%c0_14, %c0_15], %22 {strides = array<i32>} : memref<8x128xf32, #tpu.memory_space<vmem>>, vector<8x128xf32>,
    } else {
    }
    %c1_i32 = arith.constant 1 : i32
    %3 = arith.muli %arg0, %c1_i32 : i32
    %4 = arith.addi %3, %arg1 : i32
    %c16_i32 = arith.constant 16 : i32
    %5 = arith.muli %4, %c16_i32 : i32
    %c16_i32_1 = arith.constant 16 : i32
    %6 = arith.subi %c16_i32_1, %5 : i32
    %c16_i32_2 = arith.constant 16 : i32
    %7 = arith.cmpi sge, %6, %c16_i32_2 : i32
    %8 = arith.extui %7 : i1 to i32
    %c0_i32_3 = arith.constant 0 : i32
    %9 = arith.cmpi ne, %8, %c0_i32_3 : i32
    scf.if %9 {
      %cst = arith.constant 0.000000e+00 : f32
      %18 = vector.broadcast %cst : f32 to vector<8x128xf32>
      %c0_i32_9 = arith.constant 0 : i32
      %c8_i32 = arith.constant 8 : i32
      %19 = arith.muli %c0_i32_9, %c8_i32 : i32
      %20 = tpu.assume_multiple %19, 8 : i32
      %21 = arith.index_cast %20 : i32 to index
      %c0 = arith.constant 0 : index
      %22 = vector.load %arg2[%21, %c0] : memref<16x128xf32, #tpu.memory_space<vmem>>, vector<8x128xf32>
      %23 = arith.index_cast %20 : i32 to index
      %c0_10 = arith.constant 0 : index
      %24 = vector.load %arg3[%23, %c0_10] : memref<16x128xf32, #tpu.memory_space<vmem>>, vector<8x128xf32>
      %25 = math.log %22 : vector<8x128xf32>
      %cst_11 = arith.constant -1.000000e+02 : f32
      %26 = vector.broadcast %cst_11 : f32 to vector<8x128xf32>
      %27 = arith.maximumf %25, %26 : vector<8x128xf32>
      %cst_12 = arith.constant 1.000000e+00 : f32
      %28 = vector.broadcast %cst_12 : f32 to vector<8x128xf32>
      %29 = arith.subf %28, %22 : vector<8x128xf32>
      %30 = math.log %29 : vector<8x128xf32>
      %cst_13 = arith.constant -1.000000e+02 : f32
      %31 = vector.broadcast %cst_13 : f32 to vector<8x128xf32>
      %32 = arith.maximumf %30, %31 : vector<8x128xf32>
      %33 = arith.subf %27, %32 : vector<8x128xf32>
      %34 = arith.mulf %24, %33 : vector<8x128xf32>
      %35 = arith.addf %34, %32 : vector<8x128xf32>
      %36 = arith.mulf %22, %24 : vector<8x128xf32>
      %37 = arith.addf %18, %36 : vector<8x128xf32>
      %38 = arith.addf %22, %24 : vector<8x128xf32>
      %39 = arith.addf %18, %38 : vector<8x128xf32>
      %40 = arith.addf %18, %35 : vector<8x128xf32>
      %c1_i32_14 = arith.constant 1 : i32
      %c8_i32_15 = arith.constant 8 : i32
      %41 = arith.muli %c1_i32_14, %c8_i32_15 : i32
      %42 = tpu.assume_multiple %41, 8 : i32
      %43 = arith.index_cast %42 : i32 to index
      %c0_16 = arith.constant 0 : index
      %44 = vector.load %arg2[%43, %c0_16] : memref<16x128xf32, #tpu.memory_space<vmem>>, vector<8x128xf32>
      %45 = arith.index_cast %42 : i32 to index
      %c0_17 = arith.constant 0 : index
      %46 = vector.load %arg3[%45, %c0_17] : memref<16x128xf32, #tpu.memory_space<vmem>>, vector<8x128xf32>
      %47 = math.log %44 : vector<8x128xf32>
      %cst_18 = arith.constant -1.000000e+02 : f32
      %48 = vector.broadcast %cst_18 : f32 to vector<8x128xf32>
      %49 = arith.maximumf %47, %48 : vector<8x128xf32>
      %cst_19 = arith.constant 1.000000e+00 : f32
      %50 = vector.broadcast %cst_19 : f32 to vector<8x128xf32>
      %51 = arith.subf %50, %44 : vector<8x128xf32>
      %52 = math.log %51 : vector<8x128xf32>
      %cst_20 = arith.constant -1.000000e+02 : f32
      %53 = vector.broadcast %cst_20 : f32 to vector<8x128xf32>
      %54 = arith.maximumf %52, %53 : vector<8x128xf32>
      %55 = arith.subf %49, %54 : vector<8x128xf32>
      %56 = arith.mulf %46, %55 : vector<8x128xf32>
      %57 = arith.addf %56, %54 : vector<8x128xf32>
      %58 = arith.mulf %44, %46 : vector<8x128xf32>
      %59 = arith.addf %37, %58 : vector<8x128xf32>
      %60 = arith.addf %44, %46 : vector<8x128xf32>
      %61 = arith.addf %39, %60 : vector<8x128xf32>
      %62 = arith.addf %40, %57 : vector<8x128xf32>
      %c2_i32 = arith.constant 2 : i32
      %c0_21 = arith.constant 0 : index
      %c0_22 = arith.constant 0 : index
      %63 = vector.load %arg7[%c0_21, %c0_22] : memref<8x128xf32, #tpu.memory_space<vmem>>, vector<8x128xf32>
      %64 = arith.addf %63, %59 : vector<8x128xf32>
      %c0_23 = arith.constant 0 : index
      %c0_24 = arith.constant 0 : index
      %65 = vector.load %arg7[%c0_23, %c0_24] : memref<8x128xf32, #tpu.memory_space<vmem>>, vector<8x128xf32>
      tpu.vector_store %arg7[%c0_23, %c0_24], %64 {strides = array<i32>} : memref<8x128xf32, #tpu.memory_space<vmem>>, vector<8x128xf32>,
      %c0_25 = arith.constant 0 : index
      %c0_26 = arith.constant 0 : index
      %66 = vector.load %arg8[%c0_25, %c0_26] : memref<8x128xf32, #tpu.memory_space<vmem>>, vector<8x128xf32>
      %67 = arith.addf %66, %61 : vector<8x128xf32>
      %c0_27 = arith.constant 0 : index
      %c0_28 = arith.constant 0 : index
      %68 = vector.load %arg8[%c0_27, %c0_28] : memref<8x128xf32, #tpu.memory_space<vmem>>, vector<8x128xf32>
      tpu.vector_store %arg8[%c0_27, %c0_28], %67 {strides = array<i32>} : memref<8x128xf32, #tpu.memory_space<vmem>>, vector<8x128xf32>,
      %c0_29 = arith.constant 0 : index
      %c0_30 = arith.constant 0 : index
      %69 = vector.load %arg9[%c0_29, %c0_30] : memref<8x128xf32, #tpu.memory_space<vmem>>, vector<8x128xf32>
      %70 = arith.addf %69, %62 : vector<8x128xf32>
      %c0_31 = arith.constant 0 : index
      %c0_32 = arith.constant 0 : index
      %71 = vector.load %arg9[%c0_31, %c0_32] : memref<8x128xf32, #tpu.memory_space<vmem>>, vector<8x128xf32>
      tpu.vector_store %arg9[%c0_31, %c0_32], %70 {strides = array<i32>} : memref<8x128xf32, #tpu.memory_space<vmem>>, vector<8x128xf32>,
    } else {
    }
    %c0_i32_4 = arith.constant 0 : i32
    %10 = arith.cmpi sgt, %6, %c0_i32_4 : i32
    %c16_i32_5 = arith.constant 16 : i32
    %11 = arith.cmpi slt, %6, %c16_i32_5 : i32
    %12 = arith.andi %10, %11 : i1
    %13 = arith.extui %12 : i1 to i32
    %c0_i32_6 = arith.constant 0 : i32
    %14 = arith.cmpi ne, %13, %c0_i32_6 : i32
    scf.if %14 {
      %18 = tpu.iota {dimensions = array<i32: 0>} : vector<8x128xi32>
      %cst = arith.constant 0.000000e+00 : f32
      %19 = vector.broadcast %cst : f32 to vector<8x128xf32>
      %c0_i32_9 = arith.constant 0 : i32
      %c8_i32 = arith.constant 8 : i32
      %20 = arith.muli %c0_i32_9, %c8_i32 : i32
      %21 = tpu.assume_multiple %20, 8 : i32
      %22 = arith.index_cast %21 : i32 to index
      %c0 = arith.constant 0 : index
      %23 = vector.load %arg2[%22, %c0] : memref<16x128xf32, #tpu.memory_space<vmem>>, vector<8x128xf32>
      %24 = arith.index_cast %21 : i32 to index
      %c0_10 = arith.constant 0 : index
      %25 = vector.load %arg3[%24, %c0_10] : memref<16x128xf32, #tpu.memory_space<vmem>>, vector<8x128xf32>
      %26 = vector.broadcast %21 : i32 to vector<8x128xi32>
      %27 = arith.addi %26, %18 : vector<8x128xi32>
      %28 = vector.broadcast %6 : i32 to vector<8x128xi32>
      %29 = arith.cmpi slt, %27, %28 : vector<8x128xi32>
      %cst_11 = arith.constant 0.000000e+00 : f32
      %30 = vector.broadcast %cst_11 : f32 to vector<8x128xf32>
      %31 = arith.select %29, %23, %30 : vector<8x128xi1>, vector<8x128xf32>
      %cst_12 = arith.constant 0.000000e+00 : f32
      %32 = vector.broadcast %cst_12 : f32 to vector<8x128xf32>
      %33 = arith.select %29, %25, %32 : vector<8x128xi1>, vector<8x128xf32>
      %34 = math.log %31 : vector<8x128xf32>
      %cst_13 = arith.constant -1.000000e+02 : f32
      %35 = vector.broadcast %cst_13 : f32 to vector<8x128xf32>
      %36 = arith.maximumf %34, %35 : vector<8x128xf32>
      %cst_14 = arith.constant 1.000000e+00 : f32
      %37 = vector.broadcast %cst_14 : f32 to vector<8x128xf32>
      %38 = arith.subf %37, %31 : vector<8x128xf32>
      %39 = math.log %38 : vector<8x128xf32>
      %cst_15 = arith.constant -1.000000e+02 : f32
      %40 = vector.broadcast %cst_15 : f32 to vector<8x128xf32>
      %41 = arith.maximumf %39, %40 : vector<8x128xf32>
      %42 = arith.subf %36, %41 : vector<8x128xf32>
      %43 = arith.mulf %33, %42 : vector<8x128xf32>
      %44 = arith.addf %43, %41 : vector<8x128xf32>
      %45 = arith.mulf %31, %33 : vector<8x128xf32>
      %46 = arith.addf %19, %45 : vector<8x128xf32>
      %47 = arith.addf %31, %33 : vector<8x128xf32>
      %48 = arith.addf %19, %47 : vector<8x128xf32>
      %49 = arith.addf %19, %44 : vector<8x128xf32>
      %c1_i32_16 = arith.constant 1 : i32
      %c8_i32_17 = arith.constant 8 : i32
      %50 = arith.muli %c1_i32_16, %c8_i32_17 : i32
      %51 = tpu.assume_multiple %50, 8 : i32
      %52 = arith.index_cast %51 : i32 to index
      %c0_18 = arith.constant 0 : index
      %53 = vector.load %arg2[%52, %c0_18] : memref<16x128xf32, #tpu.memory_space<vmem>>, vector<8x128xf32>
      %54 = arith.index_cast %51 : i32 to index
      %c0_19 = arith.constant 0 : index
      %55 = vector.load %arg3[%54, %c0_19] : memref<16x128xf32, #tpu.memory_space<vmem>>, vector<8x128xf32>
      %56 = vector.broadcast %51 : i32 to vector<8x128xi32>
      %57 = arith.addi %56, %18 : vector<8x128xi32>
      %58 = vector.broadcast %6 : i32 to vector<8x128xi32>
      %59 = arith.cmpi slt, %57, %58 : vector<8x128xi32>
      %cst_20 = arith.constant 0.000000e+00 : f32
      %60 = vector.broadcast %cst_20 : f32 to vector<8x128xf32>
      %61 = arith.select %59, %53, %60 : vector<8x128xi1>, vector<8x128xf32>
      %cst_21 = arith.constant 0.000000e+00 : f32
      %62 = vector.broadcast %cst_21 : f32 to vector<8x128xf32>
      %63 = arith.select %59, %55, %62 : vector<8x128xi1>, vector<8x128xf32>
      %64 = math.log %61 : vector<8x128xf32>
      %cst_22 = arith.constant -1.000000e+02 : f32
      %65 = vector.broadcast %cst_22 : f32 to vector<8x128xf32>
      %66 = arith.maximumf %64, %65 : vector<8x128xf32>
      %cst_23 = arith.constant 1.000000e+00 : f32
      %67 = vector.broadcast %cst_23 : f32 to vector<8x128xf32>
      %68 = arith.subf %67, %61 : vector<8x128xf32>
      %69 = math.log %68 : vector<8x128xf32>
      %cst_24 = arith.constant -1.000000e+02 : f32
      %70 = vector.broadcast %cst_24 : f32 to vector<8x128xf32>
      %71 = arith.maximumf %69, %70 : vector<8x128xf32>
      %72 = arith.subf %66, %71 : vector<8x128xf32>
      %73 = arith.mulf %63, %72 : vector<8x128xf32>
      %74 = arith.addf %73, %71 : vector<8x128xf32>
      %75 = arith.mulf %61, %63 : vector<8x128xf32>
      %76 = arith.addf %46, %75 : vector<8x128xf32>
      %77 = arith.addf %61, %63 : vector<8x128xf32>
      %78 = arith.addf %48, %77 : vector<8x128xf32>
      %79 = arith.addf %49, %74 : vector<8x128xf32>
      %c2_i32 = arith.constant 2 : i32
      %c0_25 = arith.constant 0 : index
      %c0_26 = arith.constant 0 : index
      %80 = vector.load %arg7[%c0_25, %c0_26] : memref<8x128xf32, #tpu.memory_space<vmem>>, vector<8x128xf32>
      %81 = arith.addf %80, %76 : vector<8x128xf32>
      %c0_27 = arith.constant 0 : index
      %c0_28 = arith.constant 0 : index
      %82 = vector.load %arg7[%c0_27, %c0_28] : memref<8x128xf32, #tpu.memory_space<vmem>>, vector<8x128xf32>
      tpu.vector_store %arg7[%c0_27, %c0_28], %81 {strides = array<i32>} : memref<8x128xf32, #tpu.memory_space<vmem>>, vector<8x128xf32>,
      %c0_29 = arith.constant 0 : index
      %c0_30 = arith.constant 0 : index
      %83 = vector.load %arg8[%c0_29, %c0_30] : memref<8x128xf32, #tpu.memory_space<vmem>>, vector<8x128xf32>
      %84 = arith.addf %83, %78 : vector<8x128xf32>
      %c0_31 = arith.constant 0 : index
      %c0_32 = arith.constant 0 : index
      %85 = vector.load %arg8[%c0_31, %c0_32] : memref<8x128xf32, #tpu.memory_space<vmem>>, vector<8x128xf32>
      tpu.vector_store %arg8[%c0_31, %c0_32], %84 {strides = array<i32>} : memref<8x128xf32, #tpu.memory_space<vmem>>, vector<8x128xf32>,
      %c0_33 = arith.constant 0 : index
      %c0_34 = arith.constant 0 : index
      %86 = vector.load %arg9[%c0_33, %c0_34] : memref<8x128xf32, #tpu.memory_space<vmem>>, vector<8x128xf32>
      %87 = arith.addf %86, %79 : vector<8x128xf32>
      %c0_35 = arith.constant 0 : index
      %c0_36 = arith.constant 0 : index
      %88 = vector.load %arg9[%c0_35, %c0_36] : memref<8x128xf32, #tpu.memory_space<vmem>>, vector<8x128xf32>
      tpu.vector_store %arg9[%c0_35, %c0_36], %87 {strides = array<i32>} : memref<8x128xf32, #tpu.memory_space<vmem>>, vector<8x128xf32>,
    } else {
    }
    %c0_i32_7 = arith.constant 0 : i32
    %15 = arith.cmpi eq, %arg1, %c0_i32_7 : i32
    %16 = arith.extui %15 : i1 to i32
    %c0_i32_8 = arith.constant 0 : i32
    %17 = arith.cmpi ne, %16, %c0_i32_8 : i32
    scf.if %17 {
      %c0 = arith.constant 0 : index
      %c0_9 = arith.constant 0 : index
      %18 = vector.load %arg7[%c0, %c0_9] : memref<8x128xf32, #tpu.memory_space<vmem>>, vector<8x128xf32>
      %c0_10 = arith.constant 0 : index
      %c0_11 = arith.constant 0 : index
      %c0_12 = arith.constant 0 : index
      %19 = vector.load %arg4[%c0_10, %c0_11, %c0_12] : memref<1x8x128xf32, #tpu.memory_space<vmem>>, vector<1x8x128xf32>
      %20 = vector.shape_cast %19 : vector<1x8x128xf32> to vector<8x128xf32>
      %21 = vector.shape_cast %18 : vector<8x128xf32> to vector<1x8x128xf32>
      tpu.vector_store %arg4[%c0_10, %c0_11, %c0_12], %21 {strides = array<i32>} : memref<1x8x128xf32, #tpu.memory_space<vmem>>, vector<1x8x128xf32>,
      %c0_13 = arith.constant 0 : index
      %c0_14 = arith.constant 0 : index
      %22 = vector.load %arg8[%c0_13, %c0_14] : memref<8x128xf32, #tpu.memory_space<vmem>>, vector<8x128xf32>
      %c0_15 = arith.constant 0 : index
      %c0_16 = arith.constant 0 : index
      %c0_17 = arith.constant 0 : index
      %23 = vector.load %arg5[%c0_15, %c0_16, %c0_17] : memref<1x8x128xf32, #tpu.memory_space<vmem>>, vector<1x8x128xf32>
      %24 = vector.shape_cast %23 : vector<1x8x128xf32> to vector<8x128xf32>
      %25 = vector.shape_cast %22 : vector<8x128xf32> to vector<1x8x128xf32>
      tpu.vector_store %arg5[%c0_15, %c0_16, %c0_17], %25 {strides = array<i32>} : memref<1x8x128xf32, #tpu.memory_space<vmem>>, vector<1x8x128xf32>,
      %c0_18 = arith.constant 0 : index
      %c0_19 = arith.constant 0 : index
      %26 = vector.load %arg9[%c0_18, %c0_19] : memref<8x128xf32, #tpu.memory_space<vmem>>, vector<8x128xf32>
      %c0_20 = arith.constant 0 : index
      %c0_21 = arith.constant 0 : index
      %c0_22 = arith.constant 0 : index
      %27 = vector.load %arg6[%c0_20, %c0_21, %c0_22] : memref<1x8x128xf32, #tpu.memory_space<vmem>>, vector<1x8x128xf32>
      %28 = vector.shape_cast %27 : vector<1x8x128xf32> to vector<8x128xf32>
      %29 = vector.shape_cast %26 : vector<8x128xf32> to vector<1x8x128xf32>
      tpu.vector_store %arg6[%c0_20, %c0_21, %c0_22], %29 {strides = array<i32>} : memref<1x8x128xf32, #tpu.memory_space<vmem>>, vector<1x8x128xf32>,
    } else {
    }
    return
  }
  func.func @transform_0(%arg0: i32, %arg1: i32) -> (i32, i32) {
    %c1_i32 = arith.constant 1 : i32
    %0 = arith.muli %arg0, %c1_i32 : i32
    %1 = arith.addi %0, %arg1 : i32
    %c0_i32 = arith.constant 0 : i32
    %2 = arith.minsi %1, %c0_i32 : i32
    %c0_i32_0 = arith.constant 0 : i32
    %c0_i32_1 = arith.constant 0 : i32
    return %2, %c0_i32_0 : i32, i32
  }
  func.func @transform_1(%arg0: i32, %arg1: i32) -> (i32, i32) {
    %c1_i32 = arith.constant 1 : i32
    %0 = arith.muli %arg0, %c1_i32 : i32
    %1 = arith.addi %0, %arg1 : i32
    %c0_i32 = arith.constant 0 : i32
    %2 = arith.minsi %1, %c0_i32 : i32
    %c0_i32_0 = arith.constant 0 : i32
    %c0_i32_1 = arith.constant 0 : i32
    return %2, %c0_i32_0 : i32, i32
  }
  func.func @transform_2(%arg0: i32, %arg1: i32) -> (i32, i32, i32) {
    %c0_i32 = arith.constant 0 : i32
    %c0_i32_0 = arith.constant 0 : i32
    %c0_i32_1 = arith.constant 0 : i32
    return %arg0, %c0_i32, %c0_i32_0 : i32, i32, i32
  }
  func.func @transform_3(%arg0: i32, %arg1: i32) -> (i32, i32, i32) {
    %c0_i32 = arith.constant 0 : i32
    %c0_i32_0 = arith.constant 0 : i32
    %c0_i32_1 = arith.constant 0 : i32
    return %arg0, %c0_i32, %c0_i32_0 : i32, i32, i32
  }
  func.func @transform_4(%arg0: i32, %arg1: i32) -> (i32, i32, i32) {
    %c0_i32 = arith.constant 0 : i32
    %c0_i32_0 = arith.constant 0 : i32
    %c0_i32_1 = arith.constant 0 : i32
    return %arg0, %c0_i32, %c0_i32_0 : i32, i32, i32
  }
}

</mosaic_0001>

<llo_original>
// kernel: tpu_custom_call.1
$region0: #{tpu_custom_call.1}
  #allocation0 [shape = 'u32[]', space=smem, size = 0x4, offset = 0x4, fixed_abs, tag = 'smem constant byte address 0x4 - core index']
  #allocation1 [shape = 'u32[144,128]{1,0:T(1,128)}', space=vmem, size = 0x12000, scoped, tag = 'internal scratch']
  #allocation2 [shape = 'f32[8,128]{1,0:T(8,128)}', space=vmem, size = 0x1000, scoped, tag = 'scratch operand']
  #allocation3 [shape = 'f32[8,128]{1,0:T(8,128)}', space=vmem, size = 0x1000, scoped, tag = 'scratch operand']
  #allocation4 [shape = 'f32[8,128]{1,0:T(8,128)}', space=vmem, size = 0x1000, scoped, tag = 'scratch operand']
  %s0 = inlined_call_operand.hbm [shape: f32[16,128], index: 0, kind: input, shape index: {}]
  %s1 = inlined_call_operand.hbm [shape: f32[16,128], index: 1, kind: input, shape index: {}]
  %s2 = inlined_call_operand.hbm [shape: f32[1,8,128], index: 2, kind: output, shape index: {0}]
  %s3 = inlined_call_operand.hbm [shape: f32[1,8,128], index: 3, kind: output, shape index: {1}]
  %s4 = inlined_call_operand.hbm [shape: f32[1,8,128], index: 4, kind: output, shape index: {2}]
  %5 = xla_tuple %s2, %s3, %s4
  %s6 = sld [smem:[#allocation0]]
  $region58: #{tpu_custom_call.1} parent=0
    _
  %s8 = ssub.s32 1, %s6
  %s9 = scalar_select 0, %s8, %s6
  $region1: #{tpu_custom_call.1} parent=0
    #allocation5 [shape = 'u8[8192]{0}', space=vmem, size = 0x2000, scoped, tag = 'input window, operand 0, single buffered']
    #allocation6 [shape = 's32[1]{0}', space=sflag, size = 0x4, scoped, tag = 'scoped memory for tpu_custom_call.1']
    #allocation7 [shape = 's32[1]{0}', space=sflag, size = 0x4, scoped, tag = 'scoped memory for tpu_custom_call.1']
    #allocation8 [shape = 'u8[8192]{0}', space=vmem, size = 0x2000, scoped, tag = 'input window, operand 1, single buffered']
    #allocation9 [shape = 's32[1]{0}', space=sflag, size = 0x4, scoped, tag = 'scoped memory for tpu_custom_call.1']
    #allocation10 [shape = 'u8[4096]{0}', space=vmem, size = 0x1000, scoped, tag = 'output window, operand 0, single buffered']
    #allocation11 [shape = 'u8[4096]{0}', space=vmem, size = 0x1000, scoped, tag = 'output window, operand 1, single buffered']
    #allocation12 [shape = 's32[1]{0}', space=sflag, size = 0x4, scoped, tag = 'scoped memory for tpu_custom_call.1']
    #allocation13 [shape = 'u8[4096]{0}', space=vmem, size = 0x1000, scoped, tag = 'output window, operand 2, single buffered']
    %10 = vsyncpa [#allocation6], 0
    %11 = vsyncpa [#allocation9], 0
    %12 = vsyncpa [#allocation7], 0
    %13 = vsyncpa [#allocation12], 0
    // Predicated region
    $region2: #{tpu_custom_call.1} parent=1 // pred_check
      _
    $region3: #{tpu_custom_call.1} parent=1 // pred_check_branch
      %15 = sbr.rel (0) target = $region5
    $region4: #{tpu_custom_call.1} parent=1 // pred_region
      %s16 = sadd.s32 0, 0
      %p17 = scmp.lt.s32.totalorder %s16, 0
      %s18 = scalar_select %p17, %s16, 0
      %s19 = smul.u32 2, %s18
      %s21 = ssub.s32 256, 256
      %22 = vsyncadd [#allocation6], %s21
      %s23 = smul.addr %s19, 128
      %s24 = scalar_lea.hbm %s0, %s23
      %s25 = sshll.u32 [#allocation5], 4
      %s26 = int_to_ptr.vmem [resolvable:$true] %s25
      %31 = dma.hbm_to_vmem [thread:$0]  %s24, 256, %s26, [#allocation6], 128, 128, 8
    $region5: #{tpu_custom_call.1} parent=1 // pred_fallthru
      _
    // Predicated region
    $region6: #{tpu_custom_call.1} parent=1 // pred_check
      _
    $region7: #{tpu_custom_call.1} parent=1 // pred_check_branch
      %33 = sbr.rel (0) target = $region9
    $region8: #{tpu_custom_call.1} parent=1 // pred_region
      %s34 = sadd.s32 0, 0
      %p35 = scmp.lt.s32.totalorder %s34, 0
      %s36 = scalar_select %p35, %s34, 0
      %s37 = smul.u32 2, %s36
      %s39 = ssub.s32 256, 256
      %40 = vsyncadd [#allocation9], %s39
      %s41 = smul.addr %s37, 128
      %s42 = scalar_lea.hbm %s1, %s41
      %s43 = sshll.u32 [#allocation8], 4
      %s44 = int_to_ptr.vmem [resolvable:$true] %s43
      %49 = dma.hbm_to_vmem [thread:$0]  %s42, 256, %s44, [#allocation9], 128, 128, 8
    $region9: #{tpu_custom_call.1} parent=1 // pred_fallthru
      _
    // Predicated region
    $region10: #{tpu_custom_call.1} parent=1 // pred_check
      _
    $region11: #{tpu_custom_call.1} parent=1 // pred_check_branch
      %51 = sbr.rel (0) target = $region13
    $region12: #{tpu_custom_call.1} parent=1 // pred_region
      %52 = dma.done [#allocation6], 256
    $region13: #{tpu_custom_call.1} parent=1 // pred_fallthru
      _
    // Predicated region
    $region14: #{tpu_custom_call.1} parent=1 // pred_check
      _
    $region15: #{tpu_custom_call.1} parent=1 // pred_check_branch
      %54 = sbr.rel (0) target = $region17
    $region16: #{tpu_custom_call.1} parent=1 // pred_region
      %55 = dma.done [#allocation9], 256
    $region17: #{tpu_custom_call.1} parent=1 // pred_fallthru
      _
    %s56 = sadd.s32 0, 0
    %p57 = scmp.lt.s32.totalorder %s56, 0
    %s58 = scalar_select %p57, %s56, 0
    %s59 = smul.u32 2, %s58
    %s60 = sadd.s32 0, 0
    %p61 = scmp.lt.s32.totalorder %s60, 0
    %s62 = scalar_select %p61, %s60, 0
    %s63 = smul.u32 2, %s62
    %p64 = scmp.eq.s32.totalorder 0, 0
    // Predicated region
    $region18: #{tpu_custom_call.1} parent=1 // pred_check
      %p65 = pneg %p64
    $region19: #{tpu_custom_call.1} parent=1 // pred_check_branch
      %67 = sbr.rel (%p65) target = $region21
    $region20: #{tpu_custom_call.1} parent=1 // pred_region
      %68 = vst [vmem:[#allocation2] sm:$0xff] 0.0
      %69 = vst [vmem:[#allocation3] sm:$0xff] 0.0
      %70 = vst [vmem:[#allocation4] sm:$0xff] 0.0
    $region21: #{tpu_custom_call.1} parent=1 // pred_fallthru
      _
    %s71 = sadd.s32 0, 0
    %s72 = smul.u32 %s71, 16
    %s73 = ssub.s32 16, %s72
    %p74 = scmp.ge.s32.totalorder %s73, 16
    // Predicated region
    $region22: #{tpu_custom_call.1} parent=1 // pred_check
      %p75 = pneg %p74
    $region23: #{tpu_custom_call.1} parent=1 // pred_check_branch
      %77 = sbr.rel (%p75) target = $region25
    $region24: #{tpu_custom_call.1} parent=1 // pred_region
      %v78 = vld [vmem:[#allocation5] sm:$0xff]
      %v79 = vld [vmem:[#allocation8] sm:$0xff]
      %v80 = vlog2.pop %v78
      %v81 = vmul.f32 %v80, 0.6931472
      %v82 = vmax.f32 %v81, -100.0
      %v83 = vsub.f32 1.0, %v78
      %v84 = vlog2.pop %v83
      %v85 = vmul.f32 %v84, 0.6931472
      %v86 = vmax.f32 %v85, -100.0
      %v87 = vsub.f32 %v82, %v86
      %v88 = vmul.f32 %v79, %v87
      %v89 = vadd.f32 %v88, %v86
      %v90 = vmul.f32 %v78, %v79
      %v91 = vadd.f32 %v90, 0.0
      %v92 = vadd.f32 %v78, %v79
      %v93 = vadd.f32 %v92, 0.0
      %v94 = vadd.f32 %v89, 0.0
      %s95 = scalar_lea.vmem [#allocation5], 8
      %v96 = vld [vmem:[%s95] sm:$0xff]
      %s97 = scalar_lea.vmem [#allocation8], 8
      %v98 = vld [vmem:[%s97] sm:$0xff]
      %v99 = vlog2.pop %v96
      %v100 = vmul.f32 %v99, 0.6931472
      %v101 = vmax.f32 %v100, -100.0
      %v102 = vsub.f32 1.0, %v96
      %v103 = vlog2.pop %v102
      %v104 = vmul.f32 %v103, 0.6931472
      %v105 = vmax.f32 %v104, -100.0
      %v106 = vsub.f32 %v101, %v105
      %v107 = vmul.f32 %v98, %v106
      %v108 = vadd.f32 %v107, %v105
      %v109 = vmul.f32 %v96, %v98
      %v110 = vadd.f32 %v91, %v109
      %v111 = vadd.f32 %v96, %v98
      %v112 = vadd.f32 %v93, %v111
      %v113 = vadd.f32 %v94, %v108
      %v114 = vld [vmem:[#allocation2] sm:$0xff]
      %v115 = vadd.f32 %v114, %v110
      %116 = vst [vmem:[#allocation2] sm:$0xff] %v115
      %v117 = vld [vmem:[#allocation3] sm:$0xff]
      %v118 = vadd.f32 %v117, %v112
      %119 = vst [vmem:[#allocation3] sm:$0xff] %v118
      %v120 = vld [vmem:[#allocation4] sm:$0xff]
      %v121 = vadd.f32 %v120, %v113
      %122 = vst [vmem:[#allocation4] sm:$0xff] %v121
    $region25: #{tpu_custom_call.1} parent=1 // pred_fallthru
      _
    %p123 = scmp.gt.s32.totalorder %s73, 0
    %p124 = scmp.lt.s32.totalorder %s73, 16
    %p125 = pnand %p123, %p124
    %p126 = pneg %p125
    // Predicated region
    $region26: #{tpu_custom_call.1} parent=1 // pred_check
      _
    $region27: #{tpu_custom_call.1} parent=1 // pred_check_branch
      %128 = sbr.rel (%p125) target = $region29
    $region28: #{tpu_custom_call.1} parent=1 // pred_region
      %v129 = vlaneseq
      %v130 = vshrl.u32 %v129, 7
      %v131 = vld [vmem:[#allocation5] sm:$0xff]
      %v132 = vld [vmem:[#allocation8] sm:$0xff]
      %v133 = vstv 0
      %v134 = vadd.s32 %v133, %v130
      %v135 = vstv %s73
      %vm136 = vcmp.lt.s32.totalorder %v134, %v135
      %v137 = vsel %vm136, %v131, 0.0
      %v138 = vsel %vm136, %v132, 0.0
      %v139 = vlog2.pop %v137
      %v140 = vmul.f32 %v139, 0.6931472
      %v141 = vmax.f32 %v140, -100.0
      %v142 = vsub.f32 1.0, %v137
      %v143 = vlog2.pop %v142
      %v144 = vmul.f32 %v143, 0.6931472
      %v145 = vmax.f32 %v144, -100.0
      %v146 = vsub.f32 %v141, %v145
      %v147 = vmul.f32 %v138, %v146
      %v148 = vadd.f32 %v147, %v145
      %v149 = vmul.f32 %v137, %v138
      %v150 = vadd.f32 %v149, 0.0
      %v151 = vadd.f32 %v137, %v138
      %v152 = vadd.f32 %v151, 0.0
      %v153 = vadd.f32 %v148, 0.0
      %s154 = scalar_lea.vmem [#allocation5], 8
      %v155 = vld [vmem:[%s154] sm:$0xff]
      %s156 = scalar_lea.vmem [#allocation8], 8
      %v157 = vld [vmem:[%s156] sm:$0xff]
      %v158 = vstv 8
      %v159 = vadd.s32 %v158, %v130
      %vm160 = vcmp.lt.s32.totalorder %v159, %v135
      %v161 = vsel %vm160, %v155, 0.0
      %v162 = vsel %vm160, %v157, 0.0
      %v163 = vlog2.pop %v161
      %v164 = vmul.f32 %v163, 0.6931472
      %v165 = vmax.f32 %v164, -100.0
      %v166 = vsub.f32 1.0, %v161
      %v167 = vlog2.pop %v166
      %v168 = vmul.f32 %v167, 0.6931472
      %v169 = vmax.f32 %v168, -100.0
      %v170 = vsub.f32 %v165, %v169
      %v171 = vmul.f32 %v162, %v170
      %v172 = vadd.f32 %v171, %v169
      %v173 = vmul.f32 %v161, %v162
      %v174 = vadd.f32 %v150, %v173
      %v175 = vadd.f32 %v161, %v162
      %v176 = vadd.f32 %v152, %v175
      %v177 = vadd.f32 %v153, %v172
      %v178 = vld [vmem:[#allocation2] sm:$0xff]
      %v179 = vadd.f32 %v178, %v174
      %180 = vst [vmem:[#allocation2] sm:$0xff] %v179
      %v181 = vld [vmem:[#allocation3] sm:$0xff]
      %v182 = vadd.f32 %v181, %v176
      %183 = vst [vmem:[#allocation3] sm:$0xff] %v182
      %v184 = vld [vmem:[#allocation4] sm:$0xff]
      %v185 = vadd.f32 %v184, %v177
      %186 = vst [vmem:[#allocation4] sm:$0xff] %v185
    $region29: #{tpu_custom_call.1} parent=1 // pred_fallthru
      _
    // Predicated region
    $region30: #{tpu_custom_call.1} parent=1 // pred_check
      %p187 = pneg %p64
    $region31: #{tpu_custom_call.1} parent=1 // pred_check_branch
      %189 = sbr.rel (%p187) target = $region33
    $region32: #{tpu_custom_call.1} parent=1 // pred_region
      %v190 = vld [vmem:[#allocation2] sm:$0xff]
      %191 = vst [vmem:[#allocation10] sm:$0xff] %v190
      %v192 = vld [vmem:[#allocation3] sm:$0xff]
      %193 = vst [vmem:[#allocation11] sm:$0xff] %v192
      %v194 = vld [vmem:[#allocation4] sm:$0xff]
      %195 = vst [vmem:[#allocation13] sm:$0xff] %v194
    $region33: #{tpu_custom_call.1} parent=1 // pred_fallthru
      _
    // Predicated region
    $region34: #{tpu_custom_call.1} parent=1 // pred_check
      _
    $region35: #{tpu_custom_call.1} parent=1 // pred_check_branch
      %197 = sbr.rel (0) target = $region37
    $region36: #{tpu_custom_call.1} parent=1 // pred_region
      %s199 = ssub.s32 128, 128
      %200 = vsyncadd [#allocation7], %s199
      %s202 = sshll.u32 [#allocation10], 4
      %s203 = int_to_ptr.vmem [resolvable:$true] %s202
      %205 = dma.vmem_to_hbm [thread:$0]  %s203, 128, %s2, [#allocation7]
    $region37: #{tpu_custom_call.1} parent=1 // pred_fallthru
      _
    // Predicated region
    $region38: #{tpu_custom_call.1} parent=1 // pred_check
      _
    $region39: #{tpu_custom_call.1} parent=1 // pred_check_branch
      %207 = sbr.rel (0) target = $region41
    $region40: #{tpu_custom_call.1} parent=1 // pred_region
      %s209 = ssub.s32 128, 128
      %210 = vsyncadd [#allocation12], %s209
      %s212 = sshll.u32 [#allocation11], 4
      %s213 = int_to_ptr.vmem [resolvable:$true] %s212
      %215 = dma.vmem_to_hbm [thread:$0]  %s213, 128, %s3, [#allocation12]
    $region41: #{tpu_custom_call.1} parent=1 // pred_fallthru
      _
    // Predicated region
    $region42: #{tpu_custom_call.1} parent=1 // pred_check
      _
    $region43: #{tpu_custom_call.1} parent=1 // pred_check_branch
      %217 = sbr.rel (0) target = $region45
    $region44: #{tpu_custom_call.1} parent=1 // pred_region
      %s219 = ssub.s32 128, 128
      %220 = vsyncadd [#allocation12], %s219
      %s222 = sshll.u32 [#allocation13], 4
      %s223 = int_to_ptr.vmem [resolvable:$true] %s222
      %225 = dma.vmem_to_hbm [thread:$0]  %s223, 128, %s4, [#allocation12]
    $region45: #{tpu_custom_call.1} parent=1 // pred_fallthru
      _
    // Predicated region
    $region46: #{tpu_custom_call.1} parent=1 // pred_check
      _
    $region47: #{tpu_custom_call.1} parent=1 // pred_check_branch
      %227 = sbr.rel (0) target = $region49
    $region48: #{tpu_custom_call.1} parent=1 // pred_region
      %228 = dma.done [#allocation7], 128
    $region49: #{tpu_custom_call.1} parent=1 // pred_fallthru
      _
    // Predicated region
    $region50: #{tpu_custom_call.1} parent=1 // pred_check
      _
    $region51: #{tpu_custom_call.1} parent=1 // pred_check_branch
      %230 = sbr.rel (0) target = $region53
    $region52: #{tpu_custom_call.1} parent=1 // pred_region
      %231 = dma.done [#allocation12], 128
    $region53: #{tpu_custom_call.1} parent=1 // pred_fallthru
      _
    // Predicated region
    $region54: #{tpu_custom_call.1} parent=1 // pred_check
      _
    $region55: #{tpu_custom_call.1} parent=1 // pred_check_branch
      %233 = sbr.rel (0) target = $region57
    $region56: #{tpu_custom_call.1} parent=1 // pred_region
      %234 = dma.done [#allocation12], 128
    $region57: #{tpu_custom_call.1} parent=1 // pred_fallthru
      _
    %235 = vsyncpa [#allocation6], 1
    %236 = vsyncpa [#allocation9], 1
    %237 = vsyncpa [#allocation7], 1
    %238 = vsyncpa [#allocation12], 1

</llo_original>
